<compile_context>
chip_gen: v6e
topology: v6e:2x2x1
jax: 0.10.0
libtpu: 0.0.40
codegen_flags: <defaults>
</compile_context>

<pallas_src>
import functools

import jax
import jax.numpy as jnp
from jax import lax
from jax.experimental import pallas as pl
from jax.experimental.pallas import tpu as pltpu

ALPHA = 10.0                     # decompostion_tp default alpha
_ALPHA_INT = int(ALPHA)
assert _ALPHA_INT == ALPHA and _ALPHA_INT >= 1   # integer-power fast path

# Keep double-buffered in+out blocks under ~12 MiB: fits the default scoped
# VMEM limit on v5e (16 MiB) and v6e/v7x (32 MiB) without compiler overrides.
_VMEM_BUDGET = 12 * 1024 * 1024


def _int_pow(x, n):
    """x**n for a static positive integer n via repeated squaring (VPU muls)."""
    acc = None
    base = x
    while n:
        if n & 1:
            acc = base if acc is None else acc * base
        n >>= 1
        if n:
            base = base * base
    return acc


def _topk_gating_kernel(x_ref, w_ref, b_ref, o_ref, *, top_k):
    x_blk = x_ref[...]               # [TN, D] native layout, native dtype
    w = w_ref[...]                   # [E, D]  same dtype as x
    b = b_ref[...]                   # [E, 1]  f32

    num_experts = w.shape[0]
    tn = x_blk.shape[0]

    # Gate linear.  Contract over D with both operands' last dims (the
    # attention q@k^T pattern) so x needs no HBM transpose; any operand
    # transpose the MXU wants happens in VMEM.  f32 accumulation; result has
    # experts on sublanes, tokens on the lane axis.
    logits = lax.dot_general(
        w, x_blk, (((1,), (1,)), ((), ())),
        preferred_element_type=jnp.float32) + b                    # [E, TN]

    # --- decompostion_tp: kth-largest (duplicates counted) per token -------
    # torch.kthvalue(logits, E - top_k + 1) == top_k-th largest value.
    # top_k passes of "take max, mask exactly one occurrence" (tie-exact).
    neg_inf = jnp.float32(-jnp.inf)
    expert_idx = lax.broadcasted_iota(
        jnp.int32, (num_experts, tn), 0).astype(jnp.float32)       # [E, TN]
    picked = jnp.zeros((num_experts, tn), dtype=jnp.bool_)
    for _ in range(top_k):           # static, tiny trip count (= top_k)
        remaining = jnp.where(picked, neg_inf, logits)
        kth = jnp.max(remaining, axis=0, keepdims=True)            # [1, TN]
        is_max = remaining == kth
        first = jnp.min(
            jnp.where(is_max, expert_idx, jnp.float32(num_experts)),
            axis=0, keepdims=True)                                  # [1, TN]
        picked = picked | (expert_idx == first)
    mask = logits < kth                                             # [E, TN]

    # Softmax over experts of the raw logits (torch softmax dim=1).
    # NOTE: the divide stays exact on purpose -- a relative error here is
    # amplified ~alpha*e (~25x) by exp(alpha*(exp(sm)-1)) below; the final
    # softmax (uniform per-token scale) uses the cheap EUP approx reciprocal.
    m = jnp.max(logits, axis=0, keepdims=True)
    ex = jnp.exp(logits - m)
    sm = ex / jnp.sum(ex, axis=0, keepdims=True)

    # Piecewise transform fused with the final softmax (compute exp(out)
    # branch-wise, no max-subtraction needed: out <= alpha*(e-1) ~ 17.2).
    e_not_topk = _int_pow(sm + 1.0, _ALPHA_INT)          # exp(a*log(sm+1))
    e_topk = jnp.exp(ALPHA * (jnp.exp(sm) - 1.0))        # exp(a*(exp(sm)-1))
    e2 = jnp.where(mask, e_not_topk, e_topk)
    gates = e2 * pl.reciprocal(jnp.sum(e2, axis=0, keepdims=True), approx=True)

    o_ref[...] = gates.astype(o_ref.dtype)


def _choose_tile(n, d, e, x_itemsize, max_tile):
    """Pick the token-tile (lane-axis) size and grid length.

    The kernel is HBM-bound at ~(d*itemsize + e*4) B/token, so the per-step
    DMA must dwarf the ~0.35 us grid-step overhead: with D=32 a 512-token
    tile is only ~64 KiB and runs well below HBM roofline; multi-thousand
    token tiles (default 8192, ~1 MiB f32 x-block) recover it.  The tile is
    capped so double-buffered in+out blocks stay under ~12 MiB (default
    scoped-VMEM limits on v5e/v6e/v7x), and the grid keeps >= 2 steps for
    larger N so dimension_semantics=("parallel",) can shard across v7x's
    two TensorCores.
    """
    per_token = 2 * d * x_itemsize + 2 * e * 4      # double-buffered x + f32 out
    vmem_cap = max(128, int(_VMEM_BUDGET // per_token))
    cap = min(max_tile, vmem_cap)
    if n <= cap and n <= 4096:
        return n, 1                                  # single block == full array
    tile = min(cap, max(128, (n + 1) // 2))          # >= 2 grid steps
    tile = max(128, (tile // 128) * 128)             # lane-align (E, tile) output
    grid = -(-n // tile)
    return tile, grid


def topk_gating(x, gate_w, gate_b, *, top_k=2, max_tile_n=8192):
    """x: [N, D] (f32 or bf16); gate_w: [D, E]; gate_b: [E].

    Returns gates [N, E] in float32.  x is read in its native layout and
    dtype; only the tiny [E, D] weight is transposed/cast in the wrapper.
    """
    n, d = x.shape
    e = gate_w.shape[-1]
    assert 1 <= top_k <= e

    w = jnp.asarray(gate_w).T.astype(x.dtype)            # [E, D], tiny
    b = jnp.asarray(gate_b, jnp.float32).reshape(e, 1)   # [E, 1], post-accum add

    tile, grid = _choose_tile(n, d, e, jnp.dtype(x.dtype).itemsize, max_tile_n)
    # Ragged tail: padded token lanes compute on stale VMEM data, but no op
    # mixes tokens across lanes and the clipped output DMA drops those
    # columns, so no explicit masking is needed.

    kernel = functools.partial(_topk_gating_kernel, top_k=top_k)
    gates_t = pl.pallas_call(
        kernel,
        out_shape=jax.ShapeDtypeStruct((e, n), jnp.float32),
        grid_spec=pltpu.PrefetchScalarGridSpec(
            num_scalar_prefetch=0,
            grid=(grid,),
            in_specs=[
                pl.BlockSpec((tile, d), lambda i: (i, 0)),   # x [N, D], native
                pl.BlockSpec((e, d), lambda i: (0, 0)),      # w [E, D]
                pl.BlockSpec((e, 1), lambda i: (0, 0)),      # bias [E, 1]
            ],
            out_specs=pl.BlockSpec((e, tile), lambda i: (0, i)),
        ),
        compiler_params=pltpu.CompilerParams(
            dimension_semantics=("parallel",)),
    )(x, w, b)

    # [E, N] -> [N, E].
    # TODO(synk): an in-kernel transpose writing (tile, E) blocks would drop
    # this extra N*E*8 B of HBM traffic at the cost of a narrow masked store;
    # review marks it measure-before-committing, so it is left as a follow-up.
    return gates_t.T


def _reference(x, gate_w, gate_b, top_k=2, alpha=ALPHA):
    """Pure-JAX reference of the eval-mode forward pass."""
    logits = x @ gate_w + gate_b[None, :]
    sorted_desc = jnp.sort(logits, axis=-1)[:, ::-1]
    kth = sorted_desc[:, top_k - 1:top_k]      # == torch.kthvalue(E-top_k+1)
    mask = logits < kth
    sm = jax.nn.softmax(logits, axis=-1)
    out = jnp.where(mask, alpha * jnp.log(sm + 1.0), alpha * (jnp.exp(sm) - 1.0))
    return jax.nn.softmax(out, axis=-1)


if __name__ == "__main__":
    key = jax.random.PRNGKey(0)
    k_x, k_w, k_b, k_x2, k_x3 = jax.random.split(key, 5)

    D, E, TOP_K = 32, 8, 2
    gate_w = jax.random.normal(k_w, (D, E), dtype=jnp.float32) / jnp.sqrt(D)
    gate_b = jax.random.normal(k_b, (E,), dtype=jnp.float32) * 0.01
    # w_noise = zeros([E, E]) in the module; unused in eval-mode forward.

    # 1) Small shape (single full-width block), module-default top_k.
    N = 16
    x = jax.random.normal(k_x, (N, D), dtype=jnp.float32)
    gates = jax.block_until_ready(topk_gating(x, gate_w, gate_b, top_k=TOP_K))
    ref = _reference(x, gate_w, gate_b, top_k=TOP_K)
    assert gates.shape == (N, E)
    assert jnp.allclose(gates, ref, atol=2e-3, rtol=2e-3), (
        f"max abs err {jnp.max(jnp.abs(gates - ref))}")

    # 2) Multi-step grid with a ragged tail (1000 % 256 != 0): exercises the
    #    clipped-DMA path and the ("parallel",) grid sharding.
    N2 = 1000
    x2 = jax.random.normal(k_x2, (N2, D), dtype=jnp.float32)
    gates2 = jax.block_until_ready(
        topk_gating(x2, gate_w, gate_b, top_k=TOP_K, max_tile_n=256))
    ref2 = _reference(x2, gate_w, gate_b, top_k=TOP_K)
    assert gates2.shape == (N2, E)
    assert jnp.allclose(gates2, ref2, atol=2e-3, rtol=2e-3), (
        f"max abs err {jnp.max(jnp.abs(gates2 - ref2))}")

    # 3) bf16 activations pass straight through (halved HBM read, f32-accum
    #    MXU); reference uses the same bf16-rounded inputs.
    N3 = 4096
    x3 = jax.random.normal(k_x3, (N3, D), dtype=jnp.float32).astype(jnp.bfloat16)
    gates3 = jax.block_until_ready(
        topk_gating(x3, gate_w, gate_b, top_k=TOP_K, max_tile_n=1024))
    ref3 = _reference(x3.astype(jnp.float32),
                      gate_w.astype(jnp.bfloat16).astype(jnp.float32),
                      gate_b, top_k=TOP_K)
    assert gates3.shape == (N3, E)
    assert gates3.dtype == jnp.float32
    assert jnp.allclose(gates3, ref3, atol=1e-2, rtol=1e-2), (
        f"max abs err {jnp.max(jnp.abs(gates3 - ref3))}")

    print("KERNEL_OK")
</pallas_src>

<mosaic_0001>
module attributes {stable_mosaic.version = 11 : i64} {
  func.func @_topk_gating_kernel(%arg0: i32, %arg1: memref<16x32xf32, #tpu.memory_space<vmem>>, %arg2: memref<8x32xf32, #tpu.memory_space<vmem>>, %arg3: memref<8x1xf32, #tpu.memory_space<vmem>>, %arg4: memref<8x16xf32, #tpu.memory_space<vmem>>) attributes {dimension_semantics = [#tpu.dimension_semantics<parallel>], iteration_bounds = array<i64: 1>, scalar_prefetch = 0 : i64, scratch_operands = 0 : i64, tpu.core_type = #tpu.core_type<tc>, window_params = [{transform_indices = @transform_0, window_bounds = array<i64: 16, 32>}, {pipeline_mode = #tpu.pipeline_mode<synchronous>, transform_indices = @transform_1, window_bounds = array<i64: 8, 32>}, {pipeline_mode = #tpu.pipeline_mode<synchronous>, transform_indices = @transform_2, window_bounds = array<i64: 8, 1>}, {transform_indices = @transform_3, window_bounds = array<i64: 8, 16>}]} {
    %c0 = arith.constant 0 : index
    %c0_0 = arith.constant 0 : index
    %0 = vector.load %arg1[%c0, %c0_0] : memref<16x32xf32, #tpu.memory_space<vmem>>, vector<16x32xf32>
    %c0_1 = arith.constant 0 : index
    %c0_2 = arith.constant 0 : index
    %1 = vector.load %arg2[%c0_1, %c0_2] : memref<8x32xf32, #tpu.memory_space<vmem>>, vector<8x32xf32>
    %c0_3 = arith.constant 0 : index
    %c0_4 = arith.constant 0 : index
    %2 = vector.load %arg3[%c0_3, %c0_4] : memref<8x1xf32, #tpu.memory_space<vmem>>, vector<8x1xf32>
    %cst = arith.constant dense<0.000000e+00> : vector<8x16xf32>
    %3 = tpu.matmul %1, %0, %cst {dimension_numbers = #tpu.dot_dimension_numbers<[1], [1], [0], [0], [0, 0, 1, 0], [], []>} : vector<8x32xf32>, vector<16x32xf32>, vector<8x16xf32> -> vector<8x16xf32>
    %4 = vector.broadcast %2 : vector<8x1xf32> to vector<8x16xf32>
    %5 = arith.addf %3, %4 : vector<8x16xf32>
    %6 = tpu.iota {dimensions = array<i32: 0>} : vector<8x16xi32>
    %7 = arith.sitofp %6 : vector<8x16xi32> to vector<8x16xf32>
    %false = arith.constant false
    %8 = vector.broadcast %false : i1 to vector<8x16xi1>
    %cst_5 = arith.constant 0xFF800000 : f32
    %9 = vector.broadcast %cst_5 : f32 to vector<8x16xf32>
    %10 = arith.select %8, %9, %5 : vector<8x16xi1>, vector<8x16xf32>
    %cst_6 = arith.constant dense<0xFF800000> : vector<16xf32>
    %11 = vector.multi_reduction <maximumf>, %10, %cst_6 [0] : vector<8x16xf32> to vector<16xf32>
    %12 = vector.shape_cast %11 : vector<16xf32> to vector<1x16xf32>
    %13 = vector.broadcast %12 : vector<1x16xf32> to vector<8x16xf32>
    %14 = arith.cmpf oeq, %10, %13 : vector<8x16xf32>
    %cst_7 = arith.constant 8.000000e+00 : f32
    %15 = vector.broadcast %cst_7 : f32 to vector<8x16xf32>
    %16 = arith.select %14, %7, %15 : vector<8x16xi1>, vector<8x16xf32>
    %cst_8 = arith.constant dense<0x7F800000> : vector<16xf32>
    %17 = vector.multi_reduction <minimumf>, %16, %cst_8 [0] : vector<8x16xf32> to vector<16xf32>
    %18 = vector.shape_cast %17 : vector<16xf32> to vector<1x16xf32>
    %19 = vector.broadcast %18 : vector<1x16xf32> to vector<8x16xf32>
    %20 = arith.cmpf oeq, %7, %19 : vector<8x16xf32>
    %21 = arith.ori %8, %20 : vector<8x16xi1>
    %cst_9 = arith.constant 0xFF800000 : f32
    %22 = vector.broadcast %cst_9 : f32 to vector<8x16xf32>
    %23 = arith.select %21, %22, %5 : vector<8x16xi1>, vector<8x16xf32>
    %cst_10 = arith.constant dense<0xFF800000> : vector<16xf32>
    %24 = vector.multi_reduction <maximumf>, %23, %cst_10 [0] : vector<8x16xf32> to vector<16xf32>
    %25 = vector.shape_cast %24 : vector<16xf32> to vector<1x16xf32>
    %26 = vector.broadcast %25 : vector<1x16xf32> to vector<8x16xf32>
    %27 = arith.cmpf olt, %5, %26 : vector<8x16xf32>
    %cst_11 = arith.constant dense<0xFF800000> : vector<16xf32>
    %28 = vector.multi_reduction <maximumf>, %5, %cst_11 [0] : vector<8x16xf32> to vector<16xf32>
    %29 = vector.shape_cast %28 : vector<16xf32> to vector<1x16xf32>
    %30 = vector.broadcast %29 : vector<1x16xf32> to vector<8x16xf32>
    %31 = arith.subf %5, %30 : vector<8x16xf32>
    %32 = math.exp %31 : vector<8x16xf32>
    %cst_12 = arith.constant dense<0.000000e+00> : vector<16xf32>
    %33 = vector.multi_reduction <add>, %32, %cst_12 [0] : vector<8x16xf32> to vector<16xf32>
    %34 = vector.shape_cast %33 : vector<16xf32> to vector<1x16xf32>
    %35 = vector.broadcast %34 : vector<1x16xf32> to vector<8x16xf32>
    %36 = arith.divf %32, %35 : vector<8x16xf32>
    %cst_13 = arith.constant 1.000000e+00 : f32
    %37 = vector.broadcast %cst_13 : f32 to vector<8x16xf32>
    %38 = arith.addf %36, %37 : vector<8x16xf32>
    %39 = arith.mulf %38, %38 : vector<8x16xf32>
    %40 = arith.mulf %39, %39 : vector<8x16xf32>
    %41 = arith.mulf %40, %40 : vector<8x16xf32>
    %42 = arith.mulf %39, %41 : vector<8x16xf32>
    %43 = math.exp %36 : vector<8x16xf32>
    %cst_14 = arith.constant 1.000000e+00 : f32
    %44 = vector.broadcast %cst_14 : f32 to vector<8x16xf32>
    %45 = arith.subf %43, %44 : vector<8x16xf32>
    %cst_15 = arith.constant 1.000000e+01 : f32
    %46 = vector.broadcast %cst_15 : f32 to vector<8x16xf32>
    %47 = arith.mulf %46, %45 : vector<8x16xf32>
    %48 = math.exp %47 : vector<8x16xf32>
    %49 = arith.select %27, %42, %48 : vector<8x16xi1>, vector<8x16xf32>
    %cst_16 = arith.constant dense<0.000000e+00> : vector<16xf32>
    %50 = vector.multi_reduction <add>, %49, %cst_16 [0] : vector<8x16xf32> to vector<16xf32>
    %51 = vector.shape_cast %50 : vector<16xf32> to vector<1x16xf32>
    %52 = tpu.reciprocal %51 {approx = true} : vector<1x16xf32> -> vector<1x16xf32>
    %53 = vector.broadcast %52 : vector<1x16xf32> to vector<8x16xf32>
    %54 = arith.mulf %49, %53 : vector<8x16xf32>
    %c0_17 = arith.constant 0 : index
    %c0_18 = arith.constant 0 : index
    %55 = vector.load %arg4[%c0_17, %c0_18] : memref<8x16xf32, #tpu.memory_space<vmem>>, vector<8x16xf32>
    tpu.vector_store %arg4[%c0_17, %c0_18], %54 {strides = array<i32>} : memref<8x16xf32, #tpu.memory_space<vmem>>, vector<8x16xf32>,
    return
  }
  func.func @transform_0(%arg0: i32) -> (i32, i32) {
    %c0_i32 = arith.constant 0 : i32
    %c0_i32_0 = arith.constant 0 : i32
    return %arg0, %c0_i32 : i32, i32
  }
  func.func @transform_1(%arg0: i32) -> (i32, i32) {
    %c0_i32 = arith.constant 0 : i32
    %c0_i32_0 = arith.constant 0 : i32
    %c0_i32_1 = arith.constant 0 : i32
    return %c0_i32, %c0_i32_0 : i32, i32
  }
  func.func @transform_2(%arg0: i32) -> (i32, i32) {
    %c0_i32 = arith.constant 0 : i32
    %c0_i32_0 = arith.constant 0 : i32
    %c0_i32_1 = arith.constant 0 : i32
    return %c0_i32, %c0_i32_0 : i32, i32
  }
  func.func @transform_3(%arg0: i32) -> (i32, i32) {
    %c0_i32 = arith.constant 0 : i32
    %c0_i32_0 = arith.constant 0 : i32
    return %c0_i32, %arg0 : i32, i32
  }
}

</mosaic_0001>

<llo_original>
// kernel: tpu_custom_call.1
$region0: #{tpu_custom_call.1}
  #allocation0 [shape = 'u32[]', space=smem, size = 0x4, offset = 0x4, fixed_abs, tag = 'smem constant byte address 0x4 - core index']
  #allocation1 [shape = 'u32[144,128]{1,0:T(1,128)}', space=vmem, size = 0x12000, scoped, tag = 'internal scratch']
  %s0 = inlined_call_operand.hbm [shape: f32[16,32], index: 0, kind: input, shape index: {}]
  %s1 = inlined_call_operand.vmem [shape: f32[8,32], index: 1, kind: input, shape index: {}]
  %s2 = inlined_call_operand.vmem [shape: f32[8,1], index: 2, kind: input, shape index: {}]
  %s3 = inlined_call_operand.hbm [shape: f32[8,16], index: 3, kind: output, shape index: {}]
  %s4 = sld [smem:[#allocation0]]
  $region26: #{tpu_custom_call.1} parent=0
    _
  %s6 = ssub.s32 1, %s4
  %s7 = scalar_select 0, %s6, %s4
  $region1: #{tpu_custom_call.1} parent=0
    #allocation2 [shape = 'u8[8192]{0}', space=vmem, size = 0x2000, scoped, tag = 'input window, operand 0, single buffered']
    #allocation3 [shape = 's32[1]{0}', space=sflag, size = 0x4, scoped, tag = 'scoped memory for tpu_custom_call.1']
    #allocation4 [shape = 's32[1]{0}', space=sflag, size = 0x4, scoped, tag = 'scoped memory for tpu_custom_call.1']
    #allocation5 [shape = 'u8[4096]{0}', space=vmem, size = 0x1000, scoped, tag = 'output window, operand 0, single buffered']
    %8 = vsyncpa [#allocation3], 0
    %9 = vsyncpa [#allocation4], 0
    // Predicated region
    $region2: #{tpu_custom_call.1} parent=1 // pred_check
      _
    $region3: #{tpu_custom_call.1} parent=1 // pred_check_branch
      %11 = sbr.rel (0) target = $region5
    $region4: #{tpu_custom_call.1} parent=1 // pred_region
      %s13 = ssub.s32 256, 256
      %14 = vsyncadd [#allocation3], %s13
      %s15 = sshll.u32 [#allocation2], 4
      %s16 = int_to_ptr.vmem [resolvable:$true] %s15
      %21 = dma.hbm_to_vmem [thread:$0]  %s0, 256, %s16, [#allocation3], 128, 128, 8
    $region5: #{tpu_custom_call.1} parent=1 // pred_fallthru
      _
    // Predicated region
    $region6: #{tpu_custom_call.1} parent=1 // pred_check
      _
    $region7: #{tpu_custom_call.1} parent=1 // pred_check_branch
      %23 = sbr.rel (0) target = $region9
    $region8: #{tpu_custom_call.1} parent=1 // pred_region
      _
    $region9: #{tpu_custom_call.1} parent=1 // pred_fallthru
      _
    // Predicated region
    $region10: #{tpu_custom_call.1} parent=1 // pred_check
      _
    $region11: #{tpu_custom_call.1} parent=1 // pred_check_branch
      %25 = sbr.rel (0) target = $region13
    $region12: #{tpu_custom_call.1} parent=1 // pred_region
      _
    $region13: #{tpu_custom_call.1} parent=1 // pred_fallthru
      _
    // Predicated region
    $region14: #{tpu_custom_call.1} parent=1 // pred_check
      _
    $region15: #{tpu_custom_call.1} parent=1 // pred_check_branch
      %27 = sbr.rel (0) target = $region17
    $region16: #{tpu_custom_call.1} parent=1 // pred_region
      %28 = dma.done [#allocation3], 256
    $region17: #{tpu_custom_call.1} parent=1 // pred_fallthru
      _
    %v29 = vld [vmem:[#allocation2] sm:$0xff]
    %v30 = vld [vmem:[#allocation2 + $0x8] sm:$0xff]
    %v31 = vld [vmem:[%s1] sm:$0xff]
    %v32 = vld [vmem:[%s2] sm:$0xff]
    %34 = vset.pattern.permute.xlu0 0
    %35 = vperm.xlu0 %34, %v32
    %v36 = vpop.permute.xlu0 %35
    %vm38 = vcmask 261120
    %v40 = vsel %vm38, %v31, 0
    %v43 = vsel %vm38, %v29, 0
    %v46 = vsel %vm38, %v30, 0
    %48 = vmatprep.subr.mxu0 0.0
    %49 = vmatpush1.xpose.msra.mxu0 0.0
    %50 = vmatprep.subr.mxu0 0.0
    %51 = vmatpush1.xpose.msra.mxu0 0.0
    %52 = vmatprep.subr.mxu0 0.0
    %53 = vmatpush1.xpose.msra.mxu0 0.0
    %54 = vmatprep.subr.mxu0 0.0
    %55 = vmatpush1.xpose.msra.mxu0 0.0
    %56 = vmatprep.subr.mxu0 0.0
    %57 = vmatpush1.xpose.msra.mxu0 0.0
    %58 = vmatprep.subr.mxu0 0.0
    %59 = vmatpush1.xpose.msra.mxu0 0.0
    %60 = vmatprep.subr.mxu0 0.0
    %61 = vmatpush1.xpose.msra.mxu0 0.0
    %62 = vmatprep.subr.mxu0 0.0
    %63 = vmatpush1.xpose.msra.mxu0 0.0
    %64 = vmatprep.subr.mxu0 0.0
    %65 = vmatpush1.xpose.msra.mxu0 0.0
    %66 = vmatprep.subr.mxu0 0.0
    %67 = vmatpush1.xpose.msra.mxu0 0.0
    %68 = vmatprep.subr.mxu0 0.0
    %69 = vmatpush1.xpose.msra.mxu0 0.0
    %70 = vmatprep.subr.mxu0 0.0
    %71 = vmatpush1.xpose.msra.mxu0 0.0
    %72 = vmatprep.subr.mxu0 0.0
    %73 = vmatpush1.xpose.msra.mxu0 0.0
    %74 = vmatprep.subr.mxu0 0.0
    %75 = vmatpush1.xpose.msra.mxu0 0.0
    %76 = vmatprep.subr.mxu0 0.0
    %77 = vmatpush1.xpose.msra.mxu0 %v46
    %78 = vmatprep.subr.mxu0 0.0
    %79 = vmatpush1.xpose.msra.mxu0 %v43
    %80 = vmatprep.subr.mxu0 0.0
    %81 = vmatpush2.xpose.msra.mxu0 0.0
    %82 = vmatprep.subr.mxu0 0.0
    %83 = vmatpush2.xpose.msra.mxu0 0.0
    %84 = vmatprep.subr.mxu0 0.0
    %85 = vmatpush2.xpose.msra.mxu0 0.0
    %86 = vmatprep.subr.mxu0 0.0
    %87 = vmatpush2.xpose.msra.mxu0 0.0
    %88 = vmatprep.subr.mxu0 0.0
    %89 = vmatpush2.xpose.msra.mxu0 0.0
    %90 = vmatprep.subr.mxu0 0.0
    %91 = vmatpush2.xpose.msra.mxu0 0.0
    %92 = vmatprep.subr.mxu0 0.0
    %93 = vmatpush2.xpose.msra.mxu0 0.0
    %94 = vmatprep.subr.mxu0 0.0
    %95 = vmatpush2.xpose.msra.mxu0 0.0
    %96 = vmatprep.subr.mxu0 0.0
    %97 = vmatpush2.xpose.msra.mxu0 0.0
    %98 = vmatprep.subr.mxu0 0.0
    %99 = vmatpush2.xpose.msra.mxu0 0.0
    %100 = vmatprep.subr.mxu0 0.0
    %101 = vmatpush2.xpose.msra.mxu0 0.0
    %102 = vmatprep.subr.mxu0 0.0
    %103 = vmatpush2.xpose.msra.mxu0 0.0
    %104 = vmatprep.subr.mxu0 0.0
    %105 = vmatpush2.xpose.msra.mxu0 0.0
    %106 = vmatprep.subr.mxu0 0.0
    %107 = vmatpush2.xpose.msra.mxu0 0.0
    %108 = vmatprep.subr.mxu0 0.0
    %109 = vmatpush2.xpose.msra.mxu0 0.0
    %110 = vmatprep.subr.mxu0 0.0
    %111 = vmatpush2.xpose.msra.mxu0 0.0
    %112 = vmatprep.mubr.f32.mxu0 0.0
    %113 = vmatmul.mubr.f32.gmra.mxu0 %v40
    %v114 = vpop.f32.mrf.mxu0
    %v115 = vadd.f32 %v36, %v114
    %v116 = vpop.f32.mrf.mxu0
    %117 = vdwg.mxu0
    %v118 = vlaneseq
    %v119 = vshrl.u32 %v118, 7
    %v120 = vcvt.s32.f32 %v119
    %vm121 = vcmask 130048
    %v122 = vsel %vm121, %v115, -inf
    %v123 = vrot.slane %v122, 4
    %v124 = vmax.f32 %v122, %v123
    %v125 = vrot.slane %v124, 2
    %v126 = vmax.f32 %v124, %v125
    %v127 = vrot.slane %v126, 1
    %v128 = vmax.f32 %v126, %v127
    %vm129 = vcmp.eq.f32.partialorder %v115, %v128
    %v130 = vsel %vm129, %v120, 8.0
    %v131 = vsel %vm121, %v130, inf
    %v132 = vrot.slane %v131, 4
    %v133 = vmin.f32 %v131, %v132
    %v134 = vrot.slane %v133, 2
    %v135 = vmin.f32 %v133, %v134
    %v136 = vrot.slane %v135, 1
    %v137 = vmin.f32 %v135, %v136
    %vm138 = vcmp.eq.f32.partialorder %v120, %v137
    %v139 = vsel %vm138, -inf, %v115
    %v140 = vsel %vm121, %v139, -inf
    %v141 = vrot.slane %v140, 4
    %v142 = vmax.f32 %v140, %v141
    %v143 = vrot.slane %v142, 2
    %v144 = vmax.f32 %v142, %v143
    %v145 = vrot.slane %v144, 1
    %v146 = vmax.f32 %v144, %v145
    %vm147 = vcmp.lt.f32.partialorder %v115, %v146
    %v148 = vsub.f32 %v115, %v128
    %v149 = vmul.f32 %v148, 1.442695
    %v150 = vpow.pop %v149
    %v151 = vsel %vm121, %v150, 0.0
    %v152 = vrot.slane %v151, 4
    %v153 = vadd.f32 %v151, %v152
    %v154 = vrot.slane %v153, 2
    %v155 = vadd.f32 %v153, %v154
    %v156 = vrot.slane %v155, 1
    %v157 = vadd.f32 %v155, %v156
    %v158 = vrcp.pop %v157
    %v159 = vmul.f32 %v150, %v158
    %v160 = vadd.f32 %v159, 1.0
    %v161 = vmul.f32 %v160, %v160
    %v162 = vmul.f32 %v161, %v161
    %v163 = vmul.f32 %v162, %v162
    %v164 = vmul.f32 %v161, %v163
    %v165 = vmul.f32 %v159, 1.442695
    %v166 = vpow.pop %v165
    %v167 = vsub.f32 %v166, 1.0
    %v168 = vmul.f32 %v167, 10.0
    %v169 = vmul.f32 %v168, 1.442695
    %v170 = vpow.pop %v169
    %v171 = vsel %vm147, %v164, %v170
    %v172 = vsel %vm121, %v171, 0.0
    %v173 = vrot.slane %v172, 4
    %v174 = vadd.f32 %v172, %v173
    %v175 = vrot.slane %v174, 2
    %v176 = vadd.f32 %v174, %v175
    %v177 = vrot.slane %v176, 1
    %v178 = vadd.f32 %v176, %v177
    %v179 = vrcp.pop %v178
    %v180 = vmul.f32 %v171, %v179
    %181 = vst.msk [vmem:[#allocation5] sm:$0xff] %vm121, %v180
    // Predicated region
    $region18: #{tpu_custom_call.1} parent=1 // pred_check
      _
    $region19: #{tpu_custom_call.1} parent=1 // pred_check_branch
      %183 = sbr.rel (0) target = $region21
    $region20: #{tpu_custom_call.1} parent=1 // pred_region
      %s185 = ssub.s32 128, 128
      %186 = vsyncadd [#allocation4], %s185
      %s188 = sshll.u32 [#allocation5], 4
      %s189 = int_to_ptr.vmem [resolvable:$true] %s188
      %191 = dma.vmem_to_hbm [thread:$0]  %s189, 128, %s3, [#allocation4]
    $region21: #{tpu_custom_call.1} parent=1 // pred_fallthru
      _
    // Predicated region
    $region22: #{tpu_custom_call.1} parent=1 // pred_check
      _
    $region23: #{tpu_custom_call.1} parent=1 // pred_check_branch
      %193 = sbr.rel (0) target = $region25
    $region24: #{tpu_custom_call.1} parent=1 // pred_region
      %194 = dma.done [#allocation4], 128
    $region25: #{tpu_custom_call.1} parent=1 // pred_fallthru
      _
    %195 = vsyncpa [#allocation3], 1
    %196 = vsyncpa [#allocation4], 1

</llo_original>
